<compile_context>
chip_gen: v6e
topology: v6e:2x2x1
jax: 0.10.0
libtpu: 0.0.40
codegen_flags: <defaults>
</compile_context>

<pallas_src>
import jax
import jax.numpy as jnp
from jax.experimental import pallas as pl
from jax.experimental.pallas import tpu as pltpu


def _atan2_kernel(u_ref, v_ref, o_ref):
    u = u_ref[...].astype(jnp.float32)
    v = v_ref[...].astype(jnp.float32)

    pi = jnp.float32(jnp.pi)
    half_pi = jnp.float32(jnp.pi / 2)
    quarter_pi = jnp.float32(jnp.pi / 4)
    t_lo = jnp.float32(0.4142135623730951)   # tan(pi/8)

    au = jnp.abs(u)
    av = jnp.abs(v)
    mn = jnp.minimum(au, av)
    mx = jnp.maximum(au, av)
    # Guard u == v == 0 (torch.atan2(0, 0) == 0): makes the reciprocal safe.
    mx = jnp.where(mx == 0, jnp.float32(1.0), mx)

    # q = mn/mx in [0, 1].  Second Cephes reduction: if q > tan(pi/8) use
    # z = (q-1)/(q+1) = (mn-mx)/(mn+mx) and add pi/4, so |z| <= tan(pi/8)
    # while still needing only ONE reciprocal.
    mid = mn > t_lo * mx
    numer = jnp.where(mid, mn - mx, mn)
    denom = jnp.where(mid, mn + mx, mx)

    # EUP approx reciprocal (separate issue slot -> nearly free) + one
    # Newton-Raphson refinement; relative error ~1e-7 after refinement.
    inv = pl.reciprocal(denom, approx=True)
    inv = inv * (jnp.float32(2.0) - denom * inv)
    z = numer * inv

    # Cephes degree-9 minimax polynomial, valid for |z| <= tan(pi/8).
    zz = z * z
    p = jnp.float32(8.05374449538e-2)
    p = p * zz - jnp.float32(1.38776856032e-1)
    p = p * zz + jnp.float32(1.99777106478e-1)
    p = p * zz - jnp.float32(3.33329491539e-1)
    a = p * zz * z + z
    a = jnp.where(mid, a + quarter_pi, a)

    # Undo the min/max swap: |u| > |v|  ->  angle = pi/2 - atan(|v|/|u|).
    a = jnp.where(au > av, half_pi - a, a)
    # v < 0: reflect into (pi/2, pi].
    a = jnp.where(v < jnp.float32(0.0), pi - a, a)
    # Apply the sign of u.
    a = jnp.where(u < jnp.float32(0.0), -a, a)

    o_ref[...] = a.astype(o_ref.dtype)


def _round_up(x, m):
    return ((x + m - 1) // m) * m


def vector2angle(u, v, *, block_rows=2048):
    """p = atan2(u, v), elementwise, via a single Pallas kernel."""
    assert u.shape == v.shape and u.dtype == v.dtype
    orig_shape = u.shape
    n = u.size
    lanes = 128
    min_tile = 8 * lanes  # one f32 vreg tile

    uf = u.reshape(-1)
    vf = v.reshape(-1)

    padded = _round_up(n, min_tile)
    if padded != n:
        # Ragged tail: pad only to the next (8,128) tile (<= 1023 elements),
        # independent of block size.  Zeros are safe (kernel returns 0 for
        # u == v == 0, no NaNs).  Only this uncommon path copies the flat
        # tensor; the aligned common path below is copy-free.
        uf = jnp.pad(uf, (0, padded - n))
        vf = jnp.pad(vf, (0, padded - n))

    rows = padded // lanes                # multiple of 8
    u2 = uf.reshape(rows, lanes)
    v2 = vf.reshape(rows, lanes)

    # Tiling: large blocks amortize the ~0.35us per-grid-step overhead, but
    # keep >= 4 grid steps for big inputs so double-buffering has a steady
    # state and both v7x TensorCores (dimension_semantics="parallel") get
    # >= 2 blocks each.  Small inputs run as a single block.
    if rows >= 1024:
        br = min(block_rows, max(256, _round_up(pl.cdiv(rows, 4), 8)))
    else:
        br = rows
    grid_size = pl.cdiv(rows, br)

    cost = pl.CostEstimate(
        flops=40 * padded,
        transcendentals=padded,          # one EUP reciprocal per element
        bytes_accessed=3 * 4 * padded,   # read u, v; write p (f32)
    )

    out = pl.pallas_call(
        _atan2_kernel,
        out_shape=jax.ShapeDtypeStruct((rows, lanes), u.dtype),
        grid_spec=pltpu.PrefetchScalarGridSpec(
            num_scalar_prefetch=0,
            grid=(grid_size,),
            in_specs=[
                pl.BlockSpec((br, lanes), lambda i: (i, 0)),
                pl.BlockSpec((br, lanes), lambda i: (i, 0)),
            ],
            out_specs=pl.BlockSpec((br, lanes), lambda i: (i, 0)),
        ),
        compiler_params=pltpu.CompilerParams(
            dimension_semantics=("parallel",)),
        cost_estimate=cost,
    )(u2, v2)

    if padded != n:
        out = out.reshape(-1)[:n]
    return out.reshape(orig_shape)


if __name__ == "__main__":
    key = jax.random.PRNGKey(0)
    # Vector2Angle.forward takes `input` with input[0] = u, input[1] = v.
    # Model it as a stacked tensor of shape (2, N, C, H, W).
    x = jax.random.normal(key, (2, 2, 4, 16, 16), dtype=jnp.float32)
    u, v = x[0], x[1]

    p = vector2angle(u, v)
    jax.block_until_ready(p)

    assert p.shape == u.shape and p.dtype == u.dtype
    ref = jnp.arctan2(u, v)
    max_err = float(jnp.max(jnp.abs(p - ref)))
    assert max_err < 1e-4, f"max abs error too large: {max_err}"

    # Exercise a ragged-tail shape (forces the small pad path) and a larger
    # aligned shape (copy-free path).
    for shp in [(3, 5, 7, 9), (2, 8, 64, 64)]:
        ku, kv = jax.random.split(jax.random.PRNGKey(1))
        uu = jax.random.normal(ku, shp, dtype=jnp.float32)
        vv = jax.random.normal(kv, shp, dtype=jnp.float32)
        pp = vector2angle(uu, vv)
        jax.block_until_ready(pp)
        err = float(jnp.max(jnp.abs(pp - jnp.arctan2(uu, vv))))
        assert err < 1e-4, f"max abs error too large for {shp}: {err}"

    print("KERNEL_OK")
</pallas_src>

<mosaic_0001>
module attributes {stable_mosaic.version = 11 : i64} {
  func.func @_atan2_kernel(%arg0: i32, %arg1: memref<16x128xf32, #tpu.memory_space<vmem>>, %arg2: memref<16x128xf32, #tpu.memory_space<vmem>>, %arg3: memref<16x128xf32, #tpu.memory_space<vmem>>) attributes {dimension_semantics = [#tpu.dimension_semantics<parallel>], iteration_bounds = array<i64: 1>, scalar_prefetch = 0 : i64, scratch_operands = 0 : i64, tpu.core_type = #tpu.core_type<tc>, window_params = [{transform_indices = @transform_0, window_bounds = array<i64: 16, 128>}, {transform_indices = @transform_1, window_bounds = array<i64: 16, 128>}, {transform_indices = @transform_2, window_bounds = array<i64: 16, 128>}]} {
    %c0 = arith.constant 0 : index
    %c0_0 = arith.constant 0 : index
    %0 = vector.load %arg1[%c0, %c0_0] : memref<16x128xf32, #tpu.memory_space<vmem>>, vector<16x128xf32>
    %c0_1 = arith.constant 0 : index
    %c0_2 = arith.constant 0 : index
    %1 = vector.load %arg2[%c0_1, %c0_2] : memref<16x128xf32, #tpu.memory_space<vmem>>, vector<16x128xf32>
    %2 = math.absf %0 : vector<16x128xf32>
    %3 = math.absf %1 : vector<16x128xf32>
    %4 = arith.minimumf %2, %3 : vector<16x128xf32>
    %5 = arith.maximumf %2, %3 : vector<16x128xf32>
    %cst = arith.constant 0.000000e+00 : f32
    %6 = vector.broadcast %cst : f32 to vector<16x128xf32>
    %7 = arith.cmpf oeq, %5, %6 : vector<16x128xf32>
    %cst_3 = arith.constant 1.000000e+00 : f32
    %8 = vector.broadcast %cst_3 : f32 to vector<16x128xf32>
    %9 = arith.select %7, %8, %5 : vector<16x128xi1>, vector<16x128xf32>
    %cst_4 = arith.constant 0.414213568 : f32
    %10 = vector.broadcast %cst_4 : f32 to vector<16x128xf32>
    %11 = arith.mulf %10, %9 : vector<16x128xf32>
    %12 = arith.cmpf ogt, %4, %11 : vector<16x128xf32>
    %13 = arith.subf %4, %9 : vector<16x128xf32>
    %14 = arith.select %12, %13, %4 : vector<16x128xi1>, vector<16x128xf32>
    %15 = arith.addf %4, %9 : vector<16x128xf32>
    %16 = arith.select %12, %15, %9 : vector<16x128xi1>, vector<16x128xf32>
    %17 = tpu.reciprocal %16 {approx = true} : vector<16x128xf32> -> vector<16x128xf32>
    %18 = arith.mulf %16, %17 : vector<16x128xf32>
    %cst_5 = arith.constant 2.000000e+00 : f32
    %19 = vector.broadcast %cst_5 : f32 to vector<16x128xf32>
    %20 = arith.subf %19, %18 : vector<16x128xf32>
    %21 = arith.mulf %17, %20 : vector<16x128xf32>
    %22 = arith.mulf %14, %21 : vector<16x128xf32>
    %23 = arith.mulf %22, %22 : vector<16x128xf32>
    %cst_6 = arith.constant 0.0805374458 : f32
    %24 = vector.broadcast %cst_6 : f32 to vector<16x128xf32>
    %25 = arith.mulf %24, %23 : vector<16x128xf32>
    %cst_7 = arith.constant 0.138776854 : f32
    %26 = vector.broadcast %cst_7 : f32 to vector<16x128xf32>
    %27 = arith.subf %25, %26 : vector<16x128xf32>
    %28 = arith.mulf %27, %23 : vector<16x128xf32>
    %cst_8 = arith.constant 0.199777111 : f32
    %29 = vector.broadcast %cst_8 : f32 to vector<16x128xf32>
    %30 = arith.addf %28, %29 : vector<16x128xf32>
    %31 = arith.mulf %30, %23 : vector<16x128xf32>
    %cst_9 = arith.constant 0.333329499 : f32
    %32 = vector.broadcast %cst_9 : f32 to vector<16x128xf32>
    %33 = arith.subf %31, %32 : vector<16x128xf32>
    %34 = arith.mulf %33, %23 : vector<16x128xf32>
    %35 = arith.mulf %34, %22 : vector<16x128xf32>
    %36 = arith.addf %35, %22 : vector<16x128xf32>
    %cst_10 = arith.constant 0.785398185 : f32
    %37 = vector.broadcast %cst_10 : f32 to vector<16x128xf32>
    %38 = arith.addf %36, %37 : vector<16x128xf32>
    %39 = arith.select %12, %38, %36 : vector<16x128xi1>, vector<16x128xf32>
    %40 = arith.cmpf ogt, %2, %3 : vector<16x128xf32>
    %cst_11 = arith.constant 1.57079637 : f32
    %41 = vector.broadcast %cst_11 : f32 to vector<16x128xf32>
    %42 = arith.subf %41, %39 : vector<16x128xf32>
    %43 = arith.select %40, %42, %39 : vector<16x128xi1>, vector<16x128xf32>
    %cst_12 = arith.constant 0.000000e+00 : f32
    %44 = vector.broadcast %cst_12 : f32 to vector<16x128xf32>
    %45 = arith.cmpf olt, %1, %44 : vector<16x128xf32>
    %cst_13 = arith.constant 3.14159274 : f32
    %46 = vector.broadcast %cst_13 : f32 to vector<16x128xf32>
    %47 = arith.subf %46, %43 : vector<16x128xf32>
    %48 = arith.select %45, %47, %43 : vector<16x128xi1>, vector<16x128xf32>
    %cst_14 = arith.constant 0.000000e+00 : f32
    %49 = vector.broadcast %cst_14 : f32 to vector<16x128xf32>
    %50 = arith.cmpf olt, %0, %49 : vector<16x128xf32>
    %cst_15 = arith.constant 0.000000e+00 : f32
    %51 = vector.broadcast %cst_15 : f32 to vector<16x128xf32>
    %52 = arith.subf %51, %48 : vector<16x128xf32>
    %53 = arith.select %50, %52, %48 : vector<16x128xi1>, vector<16x128xf32>
    %c0_16 = arith.constant 0 : index
    %c0_17 = arith.constant 0 : index
    %54 = vector.load %arg3[%c0_16, %c0_17] : memref<16x128xf32, #tpu.memory_space<vmem>>, vector<16x128xf32>
    tpu.vector_store %arg3[%c0_16, %c0_17], %53 {strides = array<i32>} : memref<16x128xf32, #tpu.memory_space<vmem>>, vector<16x128xf32>,
    return
  }
  func.func @transform_0(%arg0: i32) -> (i32, i32) {
    %c0_i32 = arith.constant 0 : i32
    %c0_i32_0 = arith.constant 0 : i32
    return %arg0, %c0_i32 : i32, i32
  }
  func.func @transform_1(%arg0: i32) -> (i32, i32) {
    %c0_i32 = arith.constant 0 : i32
    %c0_i32_0 = arith.constant 0 : i32
    return %arg0, %c0_i32 : i32, i32
  }
  func.func @transform_2(%arg0: i32) -> (i32, i32) {
    %c0_i32 = arith.constant 0 : i32
    %c0_i32_0 = arith.constant 0 : i32
    return %arg0, %c0_i32 : i32, i32
  }
}

</mosaic_0001>

<llo_original>
// kernel: tpu_custom_call.1
$region0: #{tpu_custom_call.1}
  #allocation0 [shape = 'u32[]', space=smem, size = 0x4, offset = 0x4, fixed_abs, tag = 'smem constant byte address 0x4 - core index']
  #allocation1 [shape = 'u32[144,128]{1,0:T(1,128)}', space=vmem, size = 0x12000, scoped, tag = 'internal scratch']
  %s0 = inlined_call_operand.hbm [shape: f32[16,128], index: 0, kind: input, shape index: {}]
  %s1 = inlined_call_operand.hbm [shape: f32[16,128], index: 1, kind: input, shape index: {}]
  %s2 = inlined_call_operand.hbm [shape: f32[16,128], index: 2, kind: output, shape index: {}]
  %s3 = sld [smem:[#allocation0]]
  $region26: #{tpu_custom_call.1} parent=0
    _
  %s5 = ssub.s32 1, %s3
  %s6 = scalar_select 0, %s5, %s3
  $region1: #{tpu_custom_call.1} parent=0
    #allocation2 [shape = 'u8[8192]{0}', space=vmem, size = 0x2000, scoped, tag = 'input window, operand 0, single buffered']
    #allocation3 [shape = 's32[1]{0}', space=sflag, size = 0x4, scoped, tag = 'scoped memory for tpu_custom_call.1']
    #allocation4 [shape = 's32[1]{0}', space=sflag, size = 0x4, scoped, tag = 'scoped memory for tpu_custom_call.1']
    #allocation5 [shape = 'u8[8192]{0}', space=vmem, size = 0x2000, scoped, tag = 'input window, operand 1, single buffered']
    #allocation6 [shape = 's32[1]{0}', space=sflag, size = 0x4, scoped, tag = 'scoped memory for tpu_custom_call.1']
    #allocation7 [shape = 'u8[8192]{0}', space=vmem, size = 0x2000, scoped, tag = 'output window, operand 0, single buffered']
    %7 = vsyncpa [#allocation3], 0
    %8 = vsyncpa [#allocation6], 0
    %9 = vsyncpa [#allocation4], 0
    // Predicated region
    $region2: #{tpu_custom_call.1} parent=1 // pred_check
      _
    $region3: #{tpu_custom_call.1} parent=1 // pred_check_branch
      %11 = sbr.rel (0) target = $region5
    $region4: #{tpu_custom_call.1} parent=1 // pred_region
      %s13 = ssub.s32 256, 256
      %14 = vsyncadd [#allocation3], %s13
      %s15 = sshll.u32 [#allocation2], 4
      %s16 = int_to_ptr.vmem [resolvable:$true] %s15
      %21 = dma.hbm_to_vmem [thread:$0]  %s0, 256, %s16, [#allocation3], 128, 128, 8
    $region5: #{tpu_custom_call.1} parent=1 // pred_fallthru
      _
    // Predicated region
    $region6: #{tpu_custom_call.1} parent=1 // pred_check
      _
    $region7: #{tpu_custom_call.1} parent=1 // pred_check_branch
      %23 = sbr.rel (0) target = $region9
    $region8: #{tpu_custom_call.1} parent=1 // pred_region
      %s25 = ssub.s32 256, 256
      %26 = vsyncadd [#allocation6], %s25
      %s27 = sshll.u32 [#allocation5], 4
      %s28 = int_to_ptr.vmem [resolvable:$true] %s27
      %33 = dma.hbm_to_vmem [thread:$0]  %s1, 256, %s28, [#allocation6], 128, 128, 8
    $region9: #{tpu_custom_call.1} parent=1 // pred_fallthru
      _
    // Predicated region
    $region10: #{tpu_custom_call.1} parent=1 // pred_check
      _
    $region11: #{tpu_custom_call.1} parent=1 // pred_check_branch
      %35 = sbr.rel (0) target = $region13
    $region12: #{tpu_custom_call.1} parent=1 // pred_region
      %36 = dma.done [#allocation3], 256
    $region13: #{tpu_custom_call.1} parent=1 // pred_fallthru
      _
    // Predicated region
    $region14: #{tpu_custom_call.1} parent=1 // pred_check
      _
    $region15: #{tpu_custom_call.1} parent=1 // pred_check_branch
      %38 = sbr.rel (0) target = $region17
    $region16: #{tpu_custom_call.1} parent=1 // pred_region
      %39 = dma.done [#allocation6], 256
    $region17: #{tpu_custom_call.1} parent=1 // pred_fallthru
      _
    %v40 = vld [vmem:[#allocation2] sm:$0xff]
    %v41 = vld [vmem:[#allocation2 + $0x8] sm:$0xff]
    %v42 = vld [vmem:[#allocation5] sm:$0xff]
    %v43 = vld [vmem:[#allocation5 + $0x8] sm:$0xff]
    %v44 = vand.u32 2147483647, %v40
    %v45 = vand.u32 2147483647, %v41
    %v46 = vand.u32 2147483647, %v42
    %v47 = vand.u32 2147483647, %v43
    %v48 = vmin.f32 %v44, %v46
    %v49 = vmin.f32 %v45, %v47
    %v50 = vmax.f32 %v44, %v46
    %v51 = vmax.f32 %v45, %v47
    %vm52 = vcmp.eq.f32.partialorder %v50, 0.0
    %vm53 = vcmp.eq.f32.partialorder %v51, 0.0
    %v54 = vsel %vm52, 1.0, %v50
    %v55 = vsel %vm53, 1.0, %v51
    %v56 = vmul.f32 %v54, 0.41421357
    %v57 = vmul.f32 %v55, 0.41421357
    %vm58 = vcmp.gt.f32.partialorder %v48, %v56
    %vm59 = vcmp.gt.f32.partialorder %v49, %v57
    %v60 = vsub.f32 %v48, %v54
    %v61 = vsub.f32 %v49, %v55
    %v62 = vsel %vm58, %v60, %v48
    %v63 = vsel %vm59, %v61, %v49
    %v64 = vadd.f32 %v48, %v54
    %v65 = vadd.f32 %v49, %v55
    %v66 = vsel %vm58, %v64, %v54
    %v67 = vsel %vm59, %v65, %v55
    %v68 = vrcp.pop %v66
    %v69 = vrcp.pop %v67
    %v70 = vmul.f32 %v66, %v68
    %v71 = vmul.f32 %v67, %v69
    %v72 = vsub.f32 2.0, %v70
    %v73 = vsub.f32 2.0, %v71
    %v74 = vmul.f32 %v68, %v72
    %v75 = vmul.f32 %v69, %v73
    %v76 = vmul.f32 %v62, %v74
    %v77 = vmul.f32 %v63, %v75
    %v78 = vmul.f32 %v76, %v76
    %v79 = vmul.f32 %v77, %v77
    %v80 = vmul.f32 %v78, 0.080537446
    %v81 = vmul.f32 %v79, 0.080537446
    %v82 = vsub.f32 %v80, 0.13877685
    %v83 = vsub.f32 %v81, 0.13877685
    %v84 = vmul.f32 %v82, %v78
    %v85 = vmul.f32 %v83, %v79
    %v86 = vadd.f32 %v84, 0.19977711
    %v87 = vadd.f32 %v85, 0.19977711
    %v88 = vmul.f32 %v86, %v78
    %v89 = vmul.f32 %v87, %v79
    %v90 = vsub.f32 %v88, 0.3333295
    %v91 = vsub.f32 %v89, 0.3333295
    %v92 = vmul.f32 %v90, %v78
    %v93 = vmul.f32 %v91, %v79
    %v94 = vmul.f32 %v92, %v76
    %v95 = vmul.f32 %v93, %v77
    %v96 = vadd.f32 %v94, %v76
    %v97 = vadd.f32 %v95, %v77
    %v98 = vadd.f32 %v96, 0.7853982
    %v99 = vadd.f32 %v97, 0.7853982
    %v100 = vsel %vm58, %v98, %v96
    %v101 = vsel %vm59, %v99, %v97
    %vm102 = vcmp.gt.f32.partialorder %v44, %v46
    %vm103 = vcmp.gt.f32.partialorder %v45, %v47
    %v104 = vsub.f32 1.5707964, %v100
    %v105 = vsub.f32 1.5707964, %v101
    %v106 = vsel %vm102, %v104, %v100
    %v107 = vsel %vm103, %v105, %v101
    %vm108 = vcmp.lt.f32.partialorder %v42, 0.0
    %vm109 = vcmp.lt.f32.partialorder %v43, 0.0
    %v110 = vsub.f32 3.1415927, %v106
    %v111 = vsub.f32 3.1415927, %v107
    %v112 = vsel %vm108, %v110, %v106
    %v113 = vsel %vm109, %v111, %v107
    %vm114 = vcmp.lt.f32.partialorder %v40, 0.0
    %vm115 = vcmp.lt.f32.partialorder %v41, 0.0
    %v116 = vsub.f32 0.0, %v112
    %v117 = vsub.f32 0.0, %v113
    %v118 = vsel %vm114, %v116, %v112
    %v119 = vsel %vm115, %v117, %v113
    %120 = vst [vmem:[#allocation7] sm:$0xff] %v118
    %121 = vst [vmem:[#allocation7 + $0x8] sm:$0xff] %v119
    // Predicated region
    $region18: #{tpu_custom_call.1} parent=1 // pred_check
      _
    $region19: #{tpu_custom_call.1} parent=1 // pred_check_branch
      %123 = sbr.rel (0) target = $region21
    $region20: #{tpu_custom_call.1} parent=1 // pred_region
      %s125 = ssub.s32 256, 256
      %126 = vsyncadd [#allocation4], %s125
      %s127 = sshll.u32 [#allocation7], 4
      %s128 = int_to_ptr.vmem [resolvable:$true] %s127
      %133 = dma.vmem_to_hbm [thread:$0]  %s128, 256, %s2, [#allocation4], 128, 128, 8
    $region21: #{tpu_custom_call.1} parent=1 // pred_fallthru
      _
    // Predicated region
    $region22: #{tpu_custom_call.1} parent=1 // pred_check
      _
    $region23: #{tpu_custom_call.1} parent=1 // pred_check_branch
      %135 = sbr.rel (0) target = $region25
    $region24: #{tpu_custom_call.1} parent=1 // pred_region
      %136 = dma.done [#allocation4], 256
    $region25: #{tpu_custom_call.1} parent=1 // pred_fallthru
      _
    %137 = vsyncpa [#allocation3], 1
    %138 = vsyncpa [#allocation6], 1
    %139 = vsyncpa [#allocation4], 1

</llo_original>
